<compile_context>
chip_gen: v6e
topology: v6e:2x2x1
jax: 0.10.0
libtpu: 0.0.40
codegen_flags: <defaults>
</compile_context>

<pallas_src>
import functools

import jax
import jax.numpy as jnp
from jax import lax
from jax.experimental import pallas as pl
from jax.experimental.pallas import tpu as pltpu

TILE = 8      # batch tile = sublane granule
XLANES = 128  # lane width of x / Wfused / output


def lifelong_absa_kernel(mem_ref, x_ref, slab_ref, y_ref, *, L, D,
                         row_vk, row_vqc, row_mask, row_wf, row_hb):
    TL = TILE * L
    mem = mem_ref[...]                                    # (TILE*L, D), zero-masked
    x_pad = x_ref[...]                                    # (TILE, 128): [:, :D]=x, [:, D]=1

    vk = slab_ref[row_vk:row_vk + 1, 0:D]                 # (1, D)
    vqc = slab_ref[row_vqc:row_vqc + 1, 0:XLANES]         # (1, 128) = [vq | c | 0]
    mask_add = slab_ref[row_mask:row_mask + TILE, 0:TL]   # (TILE, TILE*L): 0 / -1e30

    # Folded MLP-attention logits, block-diagonal over lanes within the tile:
    #   logits[b, b*L + l] = tanh(mem[b, l]·vk + x[b]·vq + c)
    t_mem = lax.dot_general(vk, mem, (((1,), (1,)), ((), ())),
                            preferred_element_type=jnp.float32)    # (1, TILE*L)
    t_q = lax.dot_general(x_pad, vqc, (((1,), (1,)), ((), ())),
                          preferred_element_type=jnp.float32)      # (TILE, 1)
    logits = jnp.tanh(t_mem + t_q) + mask_add                      # (TILE, TILE*L)

    # softmax over each sample's own L context positions (exact divide)
    m = jnp.max(logits, axis=-1, keepdims=True)
    e = jnp.exp(logits - m)
    score = e / jnp.sum(e, axis=-1, keepdims=True)                 # (TILE, TILE*L)

    # o_lifelog = score @ memory  (block-diagonal score -> per-sample sum)
    o = jnp.dot(score, mem, preferred_element_type=jnp.float32)    # (TILE, D)

    # Fused heads: y = (x + o) @ (W @ headW) + headb, lane-dense (TILE,128) store
    xd = x_pad[:, 0:D]
    wf = slab_ref[row_wf:row_wf + D, 0:XLANES]                     # (D, 128)
    hb = slab_ref[row_hb:row_hb + 1, 0:XLANES]                     # (1, 128)
    y_ref[...] = jnp.dot(xd + o, wf,
                         preferred_element_type=jnp.float32) + hb  # (TILE, 128)


def lifelong_absa_forward(text_idx, aspect_idx, params):
    emb = params['embedding']
    B, L = text_idx.shape
    D = emb.shape[1]
    T, P, _ = params['last_w'].shape
    TP = T * P
    assert D + 1 <= XLANES and TP <= XLANES

    # ---- JAX glue: embedding gathers, SqueezeEmbedding zero-mask, aspect mean
    memory_len = jnp.sum(text_idx != 0, axis=-1)
    aspect_len = jnp.sum(aspect_idx != 0, axis=-1).astype(jnp.float32)
    seq_mask = (jnp.arange(L)[None, :] < memory_len[:, None]).astype(jnp.float32)
    memory = emb[text_idx] * seq_mask[:, :, None]                  # (B, L, D)
    x = jnp.sum(emb[aspect_idx], axis=1) / aspect_len[:, None]     # (B, D)

    # ---- pad batch to the 8-row sublane granule --------------------------
    B_pad = ((B + TILE - 1) // TILE) * TILE
    pad_b = B_pad - B
    mem_flat = jnp.pad(memory.reshape(B * L, D), ((0, pad_b * L), (0, 0)))
    x_pad = jnp.concatenate(
        [jnp.pad(x, ((0, pad_b), (0, 0))),
         jnp.ones((B_pad, 1), jnp.float32),            # ones column carries c
         jnp.zeros((B_pad, XLANES - D - 1), jnp.float32)],
        axis=1)                                        # (B_pad, 128)

    # ---- algebraic folds (constant under jit) -----------------------------
    w = params['att_weight']
    vk = params['w_k_w'].T @ w[:D]                                 # (D,)
    vq = params['w_q_w'].T @ w[D:]                                 # (D,)
    c = jnp.dot(params['w_k_b'], w[:D]) + jnp.dot(params['w_q_b'], w[D:])
    headW = jnp.transpose(params['last_w'], (2, 0, 1)).reshape(P, TP)
    wfused = params['W'] @ headW                                   # (D, T*P)
    headb = params['last_b'].reshape(TP)                           # (T*P,)

    # precomputed block-diagonal additive mask for one 8-sample tile
    col = jnp.arange(TILE * L)[None, :]
    row = jnp.arange(TILE)[:, None]
    own = (col >= row * L) & (col < (row + 1) * L)
    mask_add = jnp.where(own, 0.0, -1e30).astype(jnp.float32)      # (8, 8*L)

    # ---- one lane-dense parameter slab (single concatenate) ---------------
    LANES = max(XLANES, TILE * L)
    ROW_VK, ROW_VQC, ROW_MASK = 0, 1, 8
    ROW_WF = ROW_MASK + TILE
    ROW_HB = ROW_WF + D
    ROWS = ((ROW_HB + 1 + 7) // 8) * 8

    def block(a, rows):
        a = a.astype(jnp.float32)
        return jnp.pad(a, ((0, rows - a.shape[0]), (0, LANES - a.shape[1])))

    slab = jnp.concatenate([
        block(vk[None, :], 1),                                     # row 0
        block(jnp.concatenate([vq, c[None]])[None, :], ROW_MASK - ROW_VQC),
        block(mask_add, TILE),                                     # rows 8..15
        block(wfused, D),                                          # rows 16..16+D-1
        block(headb[None, :], ROWS - ROW_HB),                      # row 16+D, pad
    ], axis=0)                                                     # (ROWS, LANES)

    kernel = functools.partial(
        lifelong_absa_kernel, L=L, D=D,
        row_vk=ROW_VK, row_vqc=ROW_VQC, row_mask=ROW_MASK,
        row_wf=ROW_WF, row_hb=ROW_HB)

    y_pad = pl.pallas_call(
        kernel,
        grid_spec=pltpu.PrefetchScalarGridSpec(
            num_scalar_prefetch=0,
            grid=(B_pad // TILE,),
            in_specs=[
                pl.BlockSpec((TILE * L, D), lambda i: (i, 0)),   # memory tile
                pl.BlockSpec((TILE, XLANES), lambda i: (i, 0)),  # x tile
                pl.BlockSpec((ROWS, LANES), lambda i: (0, 0)),   # slab (resident)
            ],
            out_specs=pl.BlockSpec((TILE, XLANES), lambda i: (i, 0)),
        ),
        out_shape=jax.ShapeDtypeStruct((B_pad, XLANES), jnp.float32),
        compiler_params=pltpu.CompilerParams(
            dimension_semantics=("parallel",)),
    )(mem_flat, x_pad, slab)

    y_flat = y_pad[:B, :TP]
    # mimic the PyTorch list-of-(B, P) return
    return [y_flat[:, t * P:(t + 1) * P] for t in range(T)]


def reference_forward(text_idx, aspect_idx, params):
    """Pure-JAX reference mirroring the PyTorch forward."""
    emb = params['embedding']
    B, L = text_idx.shape
    D = emb.shape[1]
    T = params['last_w'].shape[0]
    memory_len = jnp.sum(text_idx != 0, axis=-1)
    aspect_len = jnp.sum(aspect_idx != 0, axis=-1).astype(jnp.float32)
    memory = emb[text_idx]
    mask = (jnp.arange(L)[None, :] < memory_len[:, None]).astype(jnp.float32)
    memory = memory * mask[:, :, None]
    x = emb[aspect_idx].sum(1) / aspect_len[:, None]
    kx = jnp.einsum('bld,ed->ble', memory, params['w_k_w']) + params['w_k_b']
    qx = x @ params['w_q_w'].T + params['w_q_b']
    w = params['att_weight']
    logits = jnp.tanh(kx @ w[:D] + (qx @ w[D:])[:, None])
    score = jax.nn.softmax(logits, axis=-1)
    o = jnp.einsum('bl,bld->bd', score, memory)
    s_out = (x + o) @ params['W']
    return [s_out @ params['last_w'][t].T + params['last_b'][t] for t in range(T)]


if __name__ == "__main__":
    V, D, P, T = 50, 32, 3, 3          # vocab, embed_dim, polarities_dim, taskcla
    B, L, La = 4, 16, 4                # batch, context len, aspect len

    key = jax.random.PRNGKey(0)
    ks = jax.random.split(key, 12)

    emb = jax.random.normal(ks[0], (V, D), jnp.float32) * 0.5
    emb = emb.at[0].set(0.0)           # padding row
    params = dict(
        embedding=emb,
        w_k_w=jax.random.normal(ks[1], (D, D), jnp.float32) * 0.1,
        w_k_b=jax.random.normal(ks[2], (D,), jnp.float32) * 0.1,
        w_q_w=jax.random.normal(ks[3], (D, D), jnp.float32) * 0.1,
        w_q_b=jax.random.normal(ks[4], (D,), jnp.float32) * 0.1,
        att_weight=jax.random.normal(ks[5], (2 * D,), jnp.float32) * 0.1,
        W=jax.random.normal(ks[6], (D, P), jnp.float32) * 0.1,
        last_w=jax.random.normal(ks[7], (T, P, P), jnp.float32) * 0.1,
        last_b=jax.random.normal(ks[8], (T, P), jnp.float32) * 0.1,
    )

    text_idx = jax.random.randint(ks[9], (B, L), 1, V, dtype=jnp.int32)
    lens = jnp.array([L, 10, 7, 12])   # row 0 full-length -> squeeze is a no-op
    text_idx = jnp.where(jnp.arange(L)[None, :] < lens[:, None], text_idx, 0)

    aspect_idx = jax.random.randint(ks[10], (B, La), 1, V, dtype=jnp.int32)
    alens = jnp.array([La, 2, 1, 3])
    aspect_idx = jnp.where(jnp.arange(La)[None, :] < alens[:, None], aspect_idx, 0)

    fwd = jax.jit(lambda ti, ai: lifelong_absa_forward(ti, ai, params))
    ys = fwd(text_idx, aspect_idx)
    ys = [jax.block_until_ready(y) for y in ys]

    refs = reference_forward(text_idx, aspect_idx, params)
    for y, r in zip(ys, refs):
        assert y.shape == (B, P)
        assert jnp.allclose(y, r, rtol=1e-4, atol=1e-4), (y, r)

    print("KERNEL_OK")
</pallas_src>

<mosaic_0001>
module attributes {stable_mosaic.version = 11 : i64} {
  func.func @lifelong_absa_kernel(%arg0: i32, %arg1: memref<128x32xf32, #tpu.memory_space<vmem>>, %arg2: memref<8x128xf32, #tpu.memory_space<vmem>>, %arg3: memref<56x128xf32, #tpu.memory_space<vmem>>, %arg4: memref<8x128xf32, #tpu.memory_space<vmem>>) attributes {dimension_semantics = [#tpu.dimension_semantics<parallel>], iteration_bounds = array<i64: 1>, scalar_prefetch = 0 : i64, scratch_operands = 0 : i64, tpu.core_type = #tpu.core_type<tc>, window_params = [{transform_indices = @transform_0, window_bounds = array<i64: 128, 32>}, {transform_indices = @transform_1, window_bounds = array<i64: 8, 128>}, {pipeline_mode = #tpu.pipeline_mode<synchronous>, transform_indices = @transform_2, window_bounds = array<i64: 56, 128>}, {transform_indices = @transform_3, window_bounds = array<i64: 8, 128>}]} {
    %c0 = arith.constant 0 : index
    %c0_0 = arith.constant 0 : index
    %0 = vector.load %arg1[%c0, %c0_0] : memref<128x32xf32, #tpu.memory_space<vmem>>, vector<128x32xf32>
    %c0_1 = arith.constant 0 : index
    %c0_2 = arith.constant 0 : index
    %1 = vector.load %arg2[%c0_1, %c0_2] : memref<8x128xf32, #tpu.memory_space<vmem>>, vector<8x128xf32>
    %c0_3 = arith.constant 0 : index
    %c0_4 = arith.constant 0 : index
    %2 = vector.load %arg3[%c0_3, %c0_4] : memref<56x128xf32, #tpu.memory_space<vmem>>, vector<1x32xf32>
    %c1 = arith.constant 1 : index
    %c0_5 = arith.constant 0 : index
    %3 = vector.load %arg3[%c1, %c0_5] : memref<56x128xf32, #tpu.memory_space<vmem>>, vector<1x128xf32>
    %c8 = arith.constant 8 : index
    %c0_6 = arith.constant 0 : index
    %4 = vector.load %arg3[%c8, %c0_6] : memref<56x128xf32, #tpu.memory_space<vmem>>, vector<8x128xf32>
    %cst = arith.constant dense<0.000000e+00> : vector<1x128xf32>
    %5 = tpu.matmul %2, %0, %cst {dimension_numbers = #tpu.dot_dimension_numbers<[1], [1], [0], [0], [0, 0, 1, 0], [], []>} : vector<1x32xf32>, vector<128x32xf32>, vector<1x128xf32> -> vector<1x128xf32>
    %cst_7 = arith.constant dense<0.000000e+00> : vector<8x1xf32>
    %6 = tpu.matmul %1, %3, %cst_7 {dimension_numbers = #tpu.dot_dimension_numbers<[1], [1], [0], [0], [0, 0, 1, 0], [], []>} : vector<8x128xf32>, vector<1x128xf32>, vector<8x1xf32> -> vector<8x1xf32>
    %7 = vector.broadcast %5 : vector<1x128xf32> to vector<8x128xf32>
    %8 = vector.broadcast %6 : vector<8x1xf32> to vector<8x128xf32>
    %9 = arith.addf %7, %8 : vector<8x128xf32>
    %10 = math.tanh %9 : vector<8x128xf32>
    %11 = arith.addf %10, %4 : vector<8x128xf32>
    %cst_8 = arith.constant dense<0xFF800000> : vector<8xf32>
    %12 = vector.multi_reduction <maximumf>, %11, %cst_8 [1] : vector<8x128xf32> to vector<8xf32>
    %13 = vector.shape_cast %12 : vector<8xf32> to vector<8x1xf32>
    %14 = vector.broadcast %13 : vector<8x1xf32> to vector<8x128xf32>
    %15 = arith.subf %11, %14 : vector<8x128xf32>
    %16 = math.exp %15 : vector<8x128xf32>
    %cst_9 = arith.constant dense<0.000000e+00> : vector<8xf32>
    %17 = vector.multi_reduction <add>, %16, %cst_9 [1] : vector<8x128xf32> to vector<8xf32>
    %18 = vector.shape_cast %17 : vector<8xf32> to vector<8x1xf32>
    %19 = vector.broadcast %18 : vector<8x1xf32> to vector<8x128xf32>
    %20 = arith.divf %16, %19 : vector<8x128xf32>
    %cst_10 = arith.constant dense<0.000000e+00> : vector<8x32xf32>
    %21 = tpu.matmul %20, %0, %cst_10 {dimension_numbers = #tpu.dot_dimension_numbers<[1], [0], [0], [1], [0, 0, 1, 1], [], []>} : vector<8x128xf32>, vector<128x32xf32>, vector<8x32xf32> -> vector<8x32xf32>
    %22 = vector.extract_strided_slice %1 {offsets = [0, 0], sizes = [8, 32], strides = [1, 1]} : vector<8x128xf32> to vector<8x32xf32>
    %c16 = arith.constant 16 : index
    %c0_11 = arith.constant 0 : index
    %23 = vector.load %arg3[%c16, %c0_11] : memref<56x128xf32, #tpu.memory_space<vmem>>, vector<32x128xf32>
    %c48 = arith.constant 48 : index
    %c0_12 = arith.constant 0 : index
    %24 = vector.load %arg3[%c48, %c0_12] : memref<56x128xf32, #tpu.memory_space<vmem>>, vector<1x128xf32>
    %25 = arith.addf %22, %21 : vector<8x32xf32>
    %cst_13 = arith.constant dense<0.000000e+00> : vector<8x128xf32>
    %26 = tpu.matmul %25, %23, %cst_13 {dimension_numbers = #tpu.dot_dimension_numbers<[1], [0], [0], [1], [0, 0, 1, 1], [], []>} : vector<8x32xf32>, vector<32x128xf32>, vector<8x128xf32> -> vector<8x128xf32>
    %27 = vector.broadcast %24 : vector<1x128xf32> to vector<8x128xf32>
    %28 = arith.addf %26, %27 : vector<8x128xf32>
    %c0_14 = arith.constant 0 : index
    %c0_15 = arith.constant 0 : index
    %29 = vector.load %arg4[%c0_14, %c0_15] : memref<8x128xf32, #tpu.memory_space<vmem>>, vector<8x128xf32>
    tpu.vector_store %arg4[%c0_14, %c0_15], %28 {strides = array<i32>} : memref<8x128xf32, #tpu.memory_space<vmem>>, vector<8x128xf32>,
    return
  }
  func.func @transform_0(%arg0: i32) -> (i32, i32) {
    %c0_i32 = arith.constant 0 : i32
    %c0_i32_0 = arith.constant 0 : i32
    return %arg0, %c0_i32 : i32, i32
  }
  func.func @transform_1(%arg0: i32) -> (i32, i32) {
    %c0_i32 = arith.constant 0 : i32
    %c0_i32_0 = arith.constant 0 : i32
    return %arg0, %c0_i32 : i32, i32
  }
  func.func @transform_2(%arg0: i32) -> (i32, i32) {
    %c0_i32 = arith.constant 0 : i32
    %c0_i32_0 = arith.constant 0 : i32
    %c0_i32_1 = arith.constant 0 : i32
    return %c0_i32, %c0_i32_0 : i32, i32
  }
  func.func @transform_3(%arg0: i32) -> (i32, i32) {
    %c0_i32 = arith.constant 0 : i32
    %c0_i32_0 = arith.constant 0 : i32
    return %arg0, %c0_i32 : i32, i32
  }
}

</mosaic_0001>

<llo_original>
// kernel: _lambda_.1
$region0: #{_lambda_.1}
  #allocation0 [shape = 'u32[]', space=smem, size = 0x4, offset = 0x4, fixed_abs, tag = 'smem constant byte address 0x4 - core index']
  #allocation1 [shape = 'u32[144,128]{1,0:T(1,128)}', space=vmem, size = 0x12000, scoped, tag = 'internal scratch']
  %s0 = inlined_call_operand.vmem [shape: f32[128,32], index: 0, kind: input, shape index: {}]
  %s1 = inlined_call_operand.vmem [shape: f32[8,128], index: 1, kind: input, shape index: {}]
  %s2 = inlined_call_operand.vmem [shape: f32[56,128], index: 2, kind: input, shape index: {}]
  %s3 = inlined_call_operand.vmem [shape: f32[8,128], index: 3, kind: output, shape index: {}]
  %s4 = sld [smem:[#allocation0]]
  $region22: #{_lambda_.1} parent=0
    _
  %s6 = ssub.s32 1, %s4
  %s7 = scalar_select 0, %s6, %s4
  // Predicated region
  $region2: #{_lambda_.1} parent=0 // pred_check
    _
  $region3: #{_lambda_.1} parent=0 // pred_check_branch
    %9 = sbr.rel (0) target = $region5
  $region4: #{_lambda_.1} parent=0 // pred_region
    _
  $region5: #{_lambda_.1} parent=0 // pred_fallthru
    _
  // Predicated region
  $region6: #{_lambda_.1} parent=0 // pred_check
    _
  $region7: #{_lambda_.1} parent=0 // pred_check_branch
    %11 = sbr.rel (0) target = $region9
  $region8: #{_lambda_.1} parent=0 // pred_region
    _
  $region9: #{_lambda_.1} parent=0 // pred_fallthru
    _
  // Predicated region
  $region10: #{_lambda_.1} parent=0 // pred_check
    _
  $region11: #{_lambda_.1} parent=0 // pred_check_branch
    %13 = sbr.rel (0) target = $region13
  $region12: #{_lambda_.1} parent=0 // pred_region
    _
  $region13: #{_lambda_.1} parent=0 // pred_fallthru
    _
  %v14 = vld [vmem:[%s0] sm:$0xff]
  %v15 = vld [vmem:[%s0 + $0x8] sm:$0xff]
  %v16 = vld [vmem:[%s0 + $0x10] sm:$0xff]
  %v17 = vld [vmem:[%s0 + $0x18] sm:$0xff]
  %v18 = vld [vmem:[%s0 + $0x20] sm:$0xff]
  %v19 = vld [vmem:[%s0 + $0x28] sm:$0xff]
  %v20 = vld [vmem:[%s0 + $0x30] sm:$0xff]
  %v21 = vld [vmem:[%s0 + $0x38] sm:$0xff]
  %v22 = vld [vmem:[%s0 + $0x40] sm:$0xff]
  %v23 = vld [vmem:[%s0 + $0x48] sm:$0xff]
  %v24 = vld [vmem:[%s0 + $0x50] sm:$0xff]
  %v25 = vld [vmem:[%s0 + $0x58] sm:$0xff]
  %v26 = vld [vmem:[%s0 + $0x60] sm:$0xff]
  %v27 = vld [vmem:[%s0 + $0x68] sm:$0xff]
  %v28 = vld [vmem:[%s0 + $0x70] sm:$0xff]
  %v29 = vld [vmem:[%s0 + $0x78] sm:$0xff]
  %v30 = vld [vmem:[%s1] sm:$0xff]
  %v31 = vld [vmem:[%s2] sm:$0x1]
  %v32 = vld [vmem:[%s2 + $0x1] sm:$0x1]
  %v33 = vld [vmem:[%s2 + $0x8] sm:$0xff]
  %vm34 = vcmask 261120
  %v36 = vsel %vm34, %v31, 0
  %v39 = vsel %vm34, %v14, 0
  %v42 = vsel %vm34, %v15, 0
  %v45 = vsel %vm34, %v16, 0
  %v48 = vsel %vm34, %v17, 0
  %v51 = vsel %vm34, %v18, 0
  %v54 = vsel %vm34, %v19, 0
  %v57 = vsel %vm34, %v20, 0
  %v60 = vsel %vm34, %v21, 0
  %v63 = vsel %vm34, %v22, 0
  %v66 = vsel %vm34, %v23, 0
  %v69 = vsel %vm34, %v24, 0
  %v72 = vsel %vm34, %v25, 0
  %v75 = vsel %vm34, %v26, 0
  %v78 = vsel %vm34, %v27, 0
  %v81 = vsel %vm34, %v28, 0
  %v84 = vsel %vm34, %v29, 0
  %86 = vmatprep.subr.mxu0 0.0
  %87 = vmatpush1.xpose.msra.mxu0 %v84
  %88 = vmatprep.subr.mxu0 0.0
  %89 = vmatpush1.xpose.msra.mxu0 %v81
  %90 = vmatprep.subr.mxu0 0.0
  %91 = vmatpush1.xpose.msra.mxu0 %v78
  %92 = vmatprep.subr.mxu0 0.0
  %93 = vmatpush1.xpose.msra.mxu0 %v75
  %94 = vmatprep.subr.mxu0 0.0
  %95 = vmatpush1.xpose.msra.mxu0 %v72
  %96 = vmatprep.subr.mxu0 0.0
  %97 = vmatpush1.xpose.msra.mxu0 %v69
  %98 = vmatprep.subr.mxu0 0.0
  %99 = vmatpush1.xpose.msra.mxu0 %v66
  %100 = vmatprep.subr.mxu0 0.0
  %101 = vmatpush1.xpose.msra.mxu0 %v63
  %102 = vmatprep.subr.mxu0 0.0
  %103 = vmatpush1.xpose.msra.mxu0 %v60
  %104 = vmatprep.subr.mxu0 0.0
  %105 = vmatpush1.xpose.msra.mxu0 %v57
  %106 = vmatprep.subr.mxu0 0.0
  %107 = vmatpush1.xpose.msra.mxu0 %v54
  %108 = vmatprep.subr.mxu0 0.0
  %109 = vmatpush1.xpose.msra.mxu0 %v51
  %110 = vmatprep.subr.mxu0 0.0
  %111 = vmatpush1.xpose.msra.mxu0 %v48
  %112 = vmatprep.subr.mxu0 0.0
  %113 = vmatpush1.xpose.msra.mxu0 %v45
  %114 = vmatprep.subr.mxu0 0.0
  %115 = vmatpush1.xpose.msra.mxu0 %v42
  %116 = vmatprep.subr.mxu0 0.0
  %117 = vmatpush1.xpose.msra.mxu0 %v39
  %118 = vmatprep.subr.mxu0 0.0
  %119 = vmatpush2.xpose.msra.mxu0 0.0
  %120 = vmatprep.subr.mxu0 0.0
  %121 = vmatpush2.xpose.msra.mxu0 0.0
  %122 = vmatprep.subr.mxu0 0.0
  %123 = vmatpush2.xpose.msra.mxu0 0.0
  %124 = vmatprep.subr.mxu0 0.0
  %125 = vmatpush2.xpose.msra.mxu0 0.0
  %126 = vmatprep.subr.mxu0 0.0
  %127 = vmatpush2.xpose.msra.mxu0 0.0
  %128 = vmatprep.subr.mxu0 0.0
  %129 = vmatpush2.xpose.msra.mxu0 0.0
  %130 = vmatprep.subr.mxu0 0.0
  %131 = vmatpush2.xpose.msra.mxu0 0.0
  %132 = vmatprep.subr.mxu0 0.0
  %133 = vmatpush2.xpose.msra.mxu0 0.0
  %134 = vmatprep.subr.mxu0 0.0
  %135 = vmatpush2.xpose.msra.mxu0 0.0
  %136 = vmatprep.subr.mxu0 0.0
  %137 = vmatpush2.xpose.msra.mxu0 0.0
  %138 = vmatprep.subr.mxu0 0.0
  %139 = vmatpush2.xpose.msra.mxu0 0.0
  %140 = vmatprep.subr.mxu0 0.0
  %141 = vmatpush2.xpose.msra.mxu0 0.0
  %142 = vmatprep.subr.mxu0 0.0
  %143 = vmatpush2.xpose.msra.mxu0 0.0
  %144 = vmatprep.subr.mxu0 0.0
  %145 = vmatpush2.xpose.msra.mxu0 0.0
  %146 = vmatprep.subr.mxu0 0.0
  %147 = vmatpush2.xpose.msra.mxu0 0.0
  %148 = vmatprep.subr.mxu0 0.0
  %149 = vmatpush2.xpose.msra.mxu0 0.0
  %150 = vmatprep.mubr.f32.mxu0 0.0
  %151 = vmatmul.mubr.f32.gmra.mxu0 %v36
  %v152 = vpop.f32.mrf.mxu0
  %v153 = vadd.f32 0.0, %v152
  %v154 = vpop.f32.mrf.mxu0
  %155 = vdwg.mxu0
  %v156 = vlaneseq
  %v157 = vshrl.u32 %v156, 7
  %v158 = vsub.s32 0, %v157
  %v159 = vrot.slane %v32, %v158
  %v160 = vmul.f32 %v30, %v159
  %161 = vadd.xlane.f32.xlu0 %v160
  %v162 = vpop.xlane.xlu0 %161
  %v163 = vlaneseq
  %v164 = vshrl.u32 %v163, 7
  %v165 = vsub.s32 0, %v164
  %v166 = vrot.slane %v153, %v165
  %v167 = vadd.f32 %v166, %v162
  %v168 = vtanh.pop %v167
  %v169 = vadd.f32 %v168, %v33
  %170 = vmax.xlane.f32.xlu0 %v169
  %v171 = vpop.xlane.xlu0 %170
  %v172 = vsub.f32 %v169, %v171
  %v173 = vmul.f32 %v172, 1.442695
  %v174 = vpow.pop %v173
  %175 = vadd.xlane.f32.xlu0 %v174
  %v176 = vpop.xlane.xlu0 %175
  %v177 = vrcp.pop %v176
  %v178 = vmul.f32 %v174, %v177
  %179 = vmatprep.subr.mxu0 0.0
  %180 = vmatpush1.msra.mxu0 %v29
  %181 = vmatprep.subr.mxu0 0.0
  %182 = vmatpush1.msra.mxu0 %v28
  %183 = vmatprep.subr.mxu0 0.0
  %184 = vmatpush1.msra.mxu0 %v27
  %185 = vmatprep.subr.mxu0 0.0
  %186 = vmatpush1.msra.mxu0 %v26
  %187 = vmatprep.subr.mxu0 0.0
  %188 = vmatpush1.msra.mxu0 %v25
  %189 = vmatprep.subr.mxu0 0.0
  %190 = vmatpush1.msra.mxu0 %v24
  %191 = vmatprep.subr.mxu0 0.0
  %192 = vmatpush1.msra.mxu0 %v23
  %193 = vmatprep.subr.mxu0 0.0
  %194 = vmatpush1.msra.mxu0 %v22
  %195 = vmatprep.subr.mxu0 0.0
  %196 = vmatpush1.msra.mxu0 %v21
  %197 = vmatprep.subr.mxu0 0.0
  %198 = vmatpush1.msra.mxu0 %v20
  %199 = vmatprep.subr.mxu0 0.0
  %200 = vmatpush1.msra.mxu0 %v19
  %201 = vmatprep.subr.mxu0 0.0
  %202 = vmatpush1.msra.mxu0 %v18
  %203 = vmatprep.subr.mxu0 0.0
  %204 = vmatpush1.msra.mxu0 %v17
  %205 = vmatprep.subr.mxu0 0.0
  %206 = vmatpush1.msra.mxu0 %v16
  %207 = vmatprep.subr.mxu0 0.0
  %208 = vmatpush1.msra.mxu0 %v15
  %209 = vmatprep.subr.mxu0 0.0
  %210 = vmatpush1.msra.mxu0 %v14
  %211 = vmatprep.subr.mxu0 0.0
  %212 = vmatpush2.msra.mxu0 0.0
  %213 = vmatprep.subr.mxu0 0.0
  %214 = vmatpush2.msra.mxu0 0.0
  %215 = vmatprep.subr.mxu0 0.0
  %216 = vmatpush2.msra.mxu0 0.0
  %217 = vmatprep.subr.mxu0 0.0
  %218 = vmatpush2.msra.mxu0 0.0
  %219 = vmatprep.subr.mxu0 0.0
  %220 = vmatpush2.msra.mxu0 0.0
  %221 = vmatprep.subr.mxu0 0.0
  %222 = vmatpush2.msra.mxu0 0.0
  %223 = vmatprep.subr.mxu0 0.0
  %224 = vmatpush2.msra.mxu0 0.0
  %225 = vmatprep.subr.mxu0 0.0
  %226 = vmatpush2.msra.mxu0 0.0
  %227 = vmatprep.subr.mxu0 0.0
  %228 = vmatpush2.msra.mxu0 0.0
  %229 = vmatprep.subr.mxu0 0.0
  %230 = vmatpush2.msra.mxu0 0.0
  %231 = vmatprep.subr.mxu0 0.0
  %232 = vmatpush2.msra.mxu0 0.0
  %233 = vmatprep.subr.mxu0 0.0
  %234 = vmatpush2.msra.mxu0 0.0
  %235 = vmatprep.subr.mxu0 0.0
  %236 = vmatpush2.msra.mxu0 0.0
  %237 = vmatprep.subr.mxu0 0.0
  %238 = vmatpush2.msra.mxu0 0.0
  %239 = vmatprep.subr.mxu0 0.0
  %240 = vmatpush2.msra.mxu0 0.0
  %241 = vmatprep.subr.mxu0 0.0
  %242 = vmatpush2.msra.mxu0 0.0
  %243 = vmatprep.mubr.f32.mxu0 0.0
  %244 = vmatmul.mubr.f32.gmra.mxu0 %v178
  %v245 = vpop.f32.mrf.mxu0
  %v246 = vadd.f32 0.0, %v245
  %v247 = vpop.f32.mrf.mxu0
  %248 = vdwg.mxu0
  %v249 = vld [vmem:[%s2 + $0x10] sm:$0xff]
  %v250 = vld [vmem:[%s2 + $0x18] sm:$0xff]
  %v251 = vld [vmem:[%s2 + $0x20] sm:$0xff]
  %v252 = vld [vmem:[%s2 + $0x28] sm:$0xff]
  %v253 = vld [vmem:[%s2 + $0x30] sm:$0x1]
  %v254 = vadd.f32 %v30, %v246
  %v255 = vlaneseq
  %v256 = vshrl.u32 %v255, 7
  %v257 = vsub.s32 0, %v256
  %v258 = vrot.slane %v253, %v257
  %v260 = vsel %vm34, %v254, 0
  %262 = vmatprep.subr.mxu0 0.0
  %263 = vmatpush1.msra.mxu0 0.0
  %264 = vmatprep.subr.mxu0 0.0
  %265 = vmatpush1.msra.mxu0 0.0
  %266 = vmatprep.subr.mxu0 0.0
  %267 = vmatpush1.msra.mxu0 0.0
  %268 = vmatprep.subr.mxu0 0.0
  %269 = vmatpush1.msra.mxu0 0.0
  %270 = vmatprep.subr.mxu0 0.0
  %271 = vmatpush1.msra.mxu0 0.0
  %272 = vmatprep.subr.mxu0 0.0
  %273 = vmatpush1.msra.mxu0 0.0
  %274 = vmatprep.subr.mxu0 0.0
  %275 = vmatpush1.msra.mxu0 0.0
  %276 = vmatprep.subr.mxu0 0.0
  %277 = vmatpush1.msra.mxu0 0.0
  %278 = vmatprep.subr.mxu0 0.0
  %279 = vmatpush1.msra.mxu0 0.0
  %280 = vmatprep.subr.mxu0 0.0
  %281 = vmatpush1.msra.mxu0 0.0
  %282 = vmatprep.subr.mxu0 0.0
  %283 = vmatpush1.msra.mxu0 0.0
  %284 = vmatprep.subr.mxu0 0.0
  %285 = vmatpush1.msra.mxu0 0.0
  %286 = vmatprep.subr.mxu0 0.0
  %287 = vmatpush1.msra.mxu0 %v252
  %288 = vmatprep.subr.mxu0 0.0
  %289 = vmatpush1.msra.mxu0 %v251
  %290 = vmatprep.subr.mxu0 0.0
  %291 = vmatpush1.msra.mxu0 %v250
  %292 = vmatprep.subr.mxu0 0.0
  %293 = vmatpush1.msra.mxu0 %v249
  %294 = vmatprep.subr.mxu0 0.0
  %295 = vmatpush2.msra.mxu0 0.0
  %296 = vmatprep.subr.mxu0 0.0
  %297 = vmatpush2.msra.mxu0 0.0
  %298 = vmatprep.subr.mxu0 0.0
  %299 = vmatpush2.msra.mxu0 0.0
  %300 = vmatprep.subr.mxu0 0.0
  %301 = vmatpush2.msra.mxu0 0.0
  %302 = vmatprep.subr.mxu0 0.0
  %303 = vmatpush2.msra.mxu0 0.0
  %304 = vmatprep.subr.mxu0 0.0
  %305 = vmatpush2.msra.mxu0 0.0
  %306 = vmatprep.subr.mxu0 0.0
  %307 = vmatpush2.msra.mxu0 0.0
  %308 = vmatprep.subr.mxu0 0.0
  %309 = vmatpush2.msra.mxu0 0.0
  %310 = vmatprep.subr.mxu0 0.0
  %311 = vmatpush2.msra.mxu0 0.0
  %312 = vmatprep.subr.mxu0 0.0
  %313 = vmatpush2.msra.mxu0 0.0
  %314 = vmatprep.subr.mxu0 0.0
  %315 = vmatpush2.msra.mxu0 0.0
  %316 = vmatprep.subr.mxu0 0.0
  %317 = vmatpush2.msra.mxu0 0.0
  %318 = vmatprep.subr.mxu0 0.0
  %319 = vmatpush2.msra.mxu0 0.0
  %320 = vmatprep.subr.mxu0 0.0
  %321 = vmatpush2.msra.mxu0 0.0
  %322 = vmatprep.subr.mxu0 0.0
  %323 = vmatpush2.msra.mxu0 0.0
  %324 = vmatprep.subr.mxu0 0.0
  %325 = vmatpush2.msra.mxu0 0.0
  %326 = vmatprep.mubr.f32.mxu0 0.0
  %327 = vmatmul.mubr.f32.gmra.mxu0 %v260
  %v328 = vpop.f32.mrf.mxu0
  %v329 = vadd.f32 %v258, %v328
  %v330 = vpop.f32.mrf.mxu0
  %331 = vdwg.mxu0
  %332 = vst [vmem:[%s3] sm:$0xff] %v329
  // Predicated region
  $region14: #{_lambda_.1} parent=0 // pred_check
    _
  $region15: #{_lambda_.1} parent=0 // pred_check_branch
    %334 = sbr.rel (0) target = $region17
  $region16: #{_lambda_.1} parent=0 // pred_region
    _
  $region17: #{_lambda_.1} parent=0 // pred_fallthru
    _
  // Predicated region
  $region18: #{_lambda_.1} parent=0 // pred_check
    _
  $region19: #{_lambda_.1} parent=0 // pred_check_branch
    %336 = sbr.rel (0) target = $region21
  $region20: #{_lambda_.1} parent=0 // pred_region
    _
  $region21: #{_lambda_.1} parent=0 // pred_fallthru
    _

</llo_original>
